<compile_context>
chip_gen: v6e
topology: v6e:2x2x1
jax: 0.10.0
libtpu: 0.0.40
codegen_flags: <defaults>
</compile_context>

<pallas_src>
import numpy as np
import jax
import jax.numpy as jnp
from jax.experimental import pallas as pl
from jax.experimental.pallas import tpu as pltpu


# --------------------------------------------------------------------------
# DCT tables (equivalent of the PyTorch module __init__)
# --------------------------------------------------------------------------

def _dct_matrix_np(n):
    """Orthonormal DCT-II matrix D: D[k, m] = s_k * cos(pi*(2m+1)k/(2n))."""
    k = np.arange(n)[:, None].astype(np.float64)
    m = np.arange(n)[None, :].astype(np.float64)
    d = np.cos(np.pi * (2.0 * m + 1.0) * k / (2.0 * n)) * np.sqrt(2.0 / n)
    d[0, :] *= 1.0 / np.sqrt(2.0)
    return d                                             # float64


def _freqs_squared_np(n):
    freqs = np.pi * np.linspace(0, n - 1, n) / n
    return freqs[:, None] ** 2 + freqs[None, :] ** 2     # float64, (n, n)


def _round_up(x, k):
    return ((x + k - 1) // k) * k


def _pick_vmem_limit_bytes():
    """<= 48 MiB on v7x (64 MiB physical), 64 MiB on v5e/v6e (128 MiB)."""
    try:
        cap = pltpu.get_tpu_info().vmem_capacity_bytes
    except Exception:  # pragma: no cover - conservative fallback
        cap = 64 * 1024 * 1024
    return int(min(64 * 1024 * 1024, (cap * 3) // 4))


# --------------------------------------------------------------------------
# Flattened (Kronecker) kernel — small N, lane-dense, MXU-friendly
# --------------------------------------------------------------------------

def _dct_blur_flat_kernel(t_ref, x_ref, d2t_ref, d2_ref, f_ref, o_ref):
    # t_ref : (Mb, 1)    per-row blur time t = sigma^2 / 2        (VMEM, f32)
    # x_ref : (Mb, N*N)  row-flattened images, Mb rows            (VMEM)
    # d2t_ref / d2_ref : (N*N, N*N) = kron(D, D)^T / kron(D, D)   (bf16)
    # f_ref : (1, N*N)   flattened squared frequencies            (f32)
    filt = jnp.exp(-f_ref[...] * t_ref[...])                            # EUP
    x = x_ref[...].astype(jnp.bfloat16)
    y = jnp.dot(x, d2t_ref[...], preferred_element_type=jnp.float32)    # 2D DCT
    y = y * filt                                                        # damping
    z = jnp.dot(y.astype(jnp.bfloat16), d2_ref[...],
                preferred_element_type=jnp.float32)                     # 2D iDCT
    o_ref[...] = z.astype(o_ref.dtype)


def _choose_block_rows(m, nn):
    """Fixed work-per-step row-block size for the (B*C, N*N) matrix.

    Sized by MXU work per step, not by "divides m" (the grid uses pl.cdiv and
    the last block may be partial).  ~256 rows when nn >= 1024, 512 when
    nn <= 256 (amortizes the ~0.35 us per-grid-step overhead).  When there is
    enough work, keep >= 2 grid steps (but >= 128 rows) so both v7x
    TensorCores get fed.
    """
    m8 = _round_up(m, 8)                       # blocks must be 8-row multiples
    target = 256 if nn >= 1024 else 512
    if m8 >= 2 * 128:
        target = min(target, max(128, _round_up(pl.cdiv(m8, 2), 8)))
    return min(target, m8)


def _dct_blur_flat(x, t, n, block_rows=None):
    b, c, h, w = x.shape
    nn = n * n
    m = b * c

    d = _dct_matrix_np(n)
    d2 = np.kron(d, d)                                     # (nn, nn)
    d2_j = jnp.asarray(d2, dtype=jnp.bfloat16)
    d2t_j = jnp.asarray(d2.T, dtype=jnp.bfloat16)
    f_flat = jnp.asarray(_freqs_squared_np(n).reshape(1, nn), dtype=jnp.float32)

    # Wrapper-side layout plumbing: lane-dense 2-D view + per-row blur time.
    x2 = x.reshape(m, nn)
    t_rows = jnp.repeat(t.astype(jnp.float32), c).reshape(m, 1)

    if block_rows is None:
        block_rows = _choose_block_rows(m, nn)
    grid = (pl.cdiv(m, block_rows),)

    itemsize = jnp.dtype(x.dtype).itemsize
    cost = pl.CostEstimate(
        flops=int(4 * m * nn * nn),                 # two (m,nn)x(nn,nn) matmuls
        transcendentals=int(m * nn),
        bytes_accessed=int(2 * m * nn * itemsize + 2 * nn * nn * 2
                           + m * 4 + nn * 4),
    )

    const = pl.Buffered(1)   # grid-invariant operands: single-buffer
    out2 = pl.pallas_call(
        _dct_blur_flat_kernel,
        out_shape=jax.ShapeDtypeStruct((m, nn), x.dtype),
        grid_spec=pltpu.PrefetchScalarGridSpec(
            num_scalar_prefetch=0,
            grid=grid,
            in_specs=[
                pl.BlockSpec((block_rows, 1), lambda i: (i, 0)),    # t per row
                pl.BlockSpec((block_rows, nn), lambda i: (i, 0)),   # image rows
                pl.BlockSpec((nn, nn), lambda i: (0, 0),
                             pipeline_mode=const),                  # D2^T
                pl.BlockSpec((nn, nn), lambda i: (0, 0),
                             pipeline_mode=const),                  # D2
                pl.BlockSpec((1, nn), lambda i: (0, 0),
                             pipeline_mode=const),                  # freqs^2
            ],
            out_specs=pl.BlockSpec((block_rows, nn), lambda i: (i, 0)),
        ),
        compiler_params=pltpu.CompilerParams(
            dimension_semantics=("parallel",),
            vmem_limit_bytes=_pick_vmem_limit_bytes(),
        ),
        cost_estimate=cost,
        input_output_aliases={1: 0},           # donate x2's HBM buffer to out
    )(t_rows, x2, d2t_j, d2_j, f_flat)

    return out2.reshape(b, c, h, w)


# --------------------------------------------------------------------------
# Separable kernel — fallback for large N (per-image M = N already fills MXU)
# --------------------------------------------------------------------------

def _dct_blur_sep_kernel(t_ref, x_ref, d_ref, dt_ref, f_ref, o_ref):
    # t_ref: (B,) blur times in SMEM (scalar prefetch); x_ref: (H, W) tile.
    # d_ref = D (bf16), dt_ref = D^T (bf16), f_ref = freqs^2 (f32).
    # All four contractions are plain lane-major 2-D matmuls (no in-kernel
    # transposes competing with vmatmul for the vector-extended slot).
    t = t_ref[pl.program_id(0)]
    filt = jnp.exp(-f_ref[...] * t)                                     # (N, N)
    x = x_ref[...].astype(jnp.bfloat16)
    # Forward 2D DCT (ortho): Y = D @ X @ D^T
    y = jnp.dot(x, dt_ref[...], preferred_element_type=jnp.float32)        # X D^T
    y = jnp.dot(d_ref[...], y.astype(jnp.bfloat16),
                preferred_element_type=jnp.float32)                        # D (.)
    y = y * filt
    # Inverse 2D DCT (ortho): Z = D^T @ Y @ D
    z = jnp.dot(y.astype(jnp.bfloat16), d_ref[...],
                preferred_element_type=jnp.float32)                        # Y D
    z = jnp.dot(dt_ref[...], z.astype(jnp.bfloat16),
                preferred_element_type=jnp.float32)                        # D^T (.)
    o_ref[...] = z.astype(o_ref.dtype)


def _dct_blur_separable(x, t, n):
    b, c, h, w = x.shape
    d_np = _dct_matrix_np(n)
    d_j = jnp.asarray(d_np, dtype=jnp.bfloat16)
    dt_j = jnp.asarray(d_np.T, dtype=jnp.bfloat16)
    f2 = jnp.asarray(_freqs_squared_np(n), dtype=jnp.float32)
    cost = pl.CostEstimate(
        flops=int(8 * b * c * h * w * n),
        transcendentals=int(b * c * n * n),
        bytes_accessed=int(2 * b * c * h * w * jnp.dtype(x.dtype).itemsize
                           + 2 * n * n * 2 + n * n * 4 + b * 4),
    )
    const = pl.Buffered(1)
    return pl.pallas_call(
        _dct_blur_sep_kernel,
        out_shape=jax.ShapeDtypeStruct((b, c, h, w), x.dtype),
        grid_spec=pltpu.PrefetchScalarGridSpec(
            num_scalar_prefetch=1,
            grid=(b, c),
            in_specs=[
                pl.BlockSpec((None, None, h, w),
                             lambda i, j, t_ref: (i, j, 0, 0)),      # image
                pl.BlockSpec((h, h), lambda i, j, t_ref: (0, 0),
                             pipeline_mode=const),                   # D
                pl.BlockSpec((h, h), lambda i, j, t_ref: (0, 0),
                             pipeline_mode=const),                   # D^T
                pl.BlockSpec((h, w), lambda i, j, t_ref: (0, 0),
                             pipeline_mode=const),                   # freqs^2
            ],
            out_specs=pl.BlockSpec((None, None, h, w),
                                   lambda i, j, t_ref: (i, j, 0, 0)),
        ),
        compiler_params=pltpu.CompilerParams(
            dimension_semantics=("parallel", "parallel"),
            vmem_limit_bytes=_pick_vmem_limit_bytes(),
        ),
        cost_estimate=cost,
    )(t.astype(jnp.float32), x, d_j, dt_j, f2)


# --------------------------------------------------------------------------
# Public entry point (DCTBlur.forward)
# --------------------------------------------------------------------------

def dct_blur(x, blur_sigmas, fwd_steps, *, force_separable=False, block_rows=None):
    """Pallas DCTBlur.forward: x is (B, C, H, W) or (B, H, W), H == W."""
    squeeze_channel = (x.ndim == 3)
    if squeeze_channel:
        x = x[:, None, :, :]
    b, c, h, w = x.shape
    assert h == w, "DCTBlur assumes a single square image_size"
    # sigma gather + t = sigma^2/2 is cheap JAX glue (kept in f32).
    t = (blur_sigmas[fwd_steps].astype(jnp.float32) ** 2) * 0.5        # (B,)
    if h <= 32 and not force_separable:
        out = _dct_blur_flat(x, t, h, block_rows=block_rows)
    else:
        out = _dct_blur_separable(x, t, h)
    return out[:, 0] if squeeze_channel else out


# --------------------------------------------------------------------------
# float64 NumPy reference (ground truth for the orthonormal DCT blur)
# --------------------------------------------------------------------------

def dct_blur_ref_np(x, blur_sigmas, fwd_steps):
    x64 = np.asarray(x, dtype=np.float64)
    squeeze = (x64.ndim == 3)
    if squeeze:
        x64 = x64[:, None]
    n = x64.shape[-1]
    sig = np.asarray(blur_sigmas, dtype=np.float64)[np.asarray(fwd_steps)]
    t = sig ** 2 / 2.0
    d = _dct_matrix_np(n)
    f2 = _freqs_squared_np(n)
    y = np.einsum('kh,bchw,lw->bckl', d, x64, d)        # D X D^T
    y = y * np.exp(-f2[None, None] * t[:, None, None, None])
    z = np.einsum('kh,bckl,lw->bchw', d, y, d)          # D^T Y D
    return z[:, 0] if squeeze else z


if __name__ == "__main__":
    B, C, N = 2, 4, 16
    num_steps = 10

    key = jax.random.PRNGKey(0)
    kx, ks = jax.random.split(key)
    x = jax.random.normal(kx, (B, C, N, N), dtype=jnp.float32)
    fwd_steps = jax.random.randint(ks, (B,), 0, num_steps, dtype=jnp.int32)
    blur_sigmas = jnp.linspace(0.1, 2.0, num_steps, dtype=jnp.float32)

    # Optimized flattened path (used automatically for N <= 32).
    out_flat = jax.block_until_ready(dct_blur(x, blur_sigmas, fwd_steps))
    # Separable fallback path (exercised explicitly for coverage).
    out_sep = jax.block_until_ready(
        dct_blur(x, blur_sigmas, fwd_steps, force_separable=True))

    ref = dct_blur_ref_np(np.asarray(x), np.asarray(blur_sigmas),
                          np.asarray(fwd_steps))

    # Tolerance budgets for the bf16 MXU operands (typical error ~5e-3).
    np.testing.assert_allclose(np.asarray(out_flat), ref, atol=3e-2, rtol=1e-2)
    np.testing.assert_allclose(np.asarray(out_sep), ref, atol=3e-2, rtol=1e-2)
    np.testing.assert_allclose(np.asarray(out_flat), np.asarray(out_sep),
                               atol=3e-2, rtol=1e-2)

    print("KERNEL_OK")
</pallas_src>

<mosaic_0001>
module attributes {stable_mosaic.version = 11 : i64} {
  func.func @_dct_blur_flat_kernel(%arg0: i32, %arg1: memref<8x1xf32, #tpu.memory_space<vmem>>, %arg2: memref<8x256xf32, #tpu.memory_space<vmem>>, %arg3: memref<256x256xbf16, #tpu.memory_space<vmem>>, %arg4: memref<256x256xbf16, #tpu.memory_space<vmem>>, %arg5: memref<1x256xf32, #tpu.memory_space<vmem>>, %arg6: memref<8x256xf32, #tpu.memory_space<vmem>>) attributes {dimension_semantics = [#tpu.dimension_semantics<parallel>], iteration_bounds = array<i64: 1>, scalar_prefetch = 0 : i64, scratch_operands = 0 : i64, tpu.core_type = #tpu.core_type<tc>, window_params = [{transform_indices = @transform_0, window_bounds = array<i64: 8, 1>}, {transform_indices = @transform_1, window_bounds = array<i64: 8, 256>}, {pipeline_mode = #tpu.pipeline_mode<synchronous>, transform_indices = @transform_2, window_bounds = array<i64: 256, 256>}, {pipeline_mode = #tpu.pipeline_mode<synchronous>, transform_indices = @transform_3, window_bounds = array<i64: 256, 256>}, {pipeline_mode = #tpu.pipeline_mode<synchronous>, transform_indices = @transform_4, window_bounds = array<i64: 1, 256>}, {transform_indices = @transform_5, window_bounds = array<i64: 8, 256>}]} {
    %c0 = arith.constant 0 : index
    %c0_0 = arith.constant 0 : index
    %0 = vector.load %arg5[%c0, %c0_0] : memref<1x256xf32, #tpu.memory_space<vmem>>, vector<1x256xf32>
    %cst = arith.constant 0.000000e+00 : f32
    %1 = vector.broadcast %cst : f32 to vector<1x256xf32>
    %2 = arith.subf %1, %0 : vector<1x256xf32>
    %c0_1 = arith.constant 0 : index
    %c0_2 = arith.constant 0 : index
    %3 = vector.load %arg1[%c0_1, %c0_2] : memref<8x1xf32, #tpu.memory_space<vmem>>, vector<8x1xf32>
    %4 = vector.broadcast %2 : vector<1x256xf32> to vector<8x256xf32>
    %5 = vector.broadcast %3 : vector<8x1xf32> to vector<8x256xf32>
    %6 = arith.mulf %4, %5 : vector<8x256xf32>
    %7 = math.exp %6 : vector<8x256xf32>
    %c0_3 = arith.constant 0 : index
    %c0_4 = arith.constant 0 : index
    %8 = vector.load %arg2[%c0_3, %c0_4] : memref<8x256xf32, #tpu.memory_space<vmem>>, vector<8x256xf32>
    %9 = arith.truncf %8 : vector<8x256xf32> to vector<8x256xbf16>
    %c0_5 = arith.constant 0 : index
    %c0_6 = arith.constant 0 : index
    %10 = vector.load %arg3[%c0_5, %c0_6] : memref<256x256xbf16, #tpu.memory_space<vmem>>, vector<256x256xbf16>
    %cst_7 = arith.constant dense<0.000000e+00> : vector<8x256xf32>
    %11 = tpu.matmul %9, %10, %cst_7 {dimension_numbers = #tpu.dot_dimension_numbers<[1], [0], [0], [1], [0, 0, 1, 1], [], []>} : vector<8x256xbf16>, vector<256x256xbf16>, vector<8x256xf32> -> vector<8x256xf32>
    %12 = arith.mulf %11, %7 : vector<8x256xf32>
    %13 = arith.truncf %12 : vector<8x256xf32> to vector<8x256xbf16>
    %c0_8 = arith.constant 0 : index
    %c0_9 = arith.constant 0 : index
    %14 = vector.load %arg4[%c0_8, %c0_9] : memref<256x256xbf16, #tpu.memory_space<vmem>>, vector<256x256xbf16>
    %cst_10 = arith.constant dense<0.000000e+00> : vector<8x256xf32>
    %15 = tpu.matmul %13, %14, %cst_10 {dimension_numbers = #tpu.dot_dimension_numbers<[1], [0], [0], [1], [0, 0, 1, 1], [], []>} : vector<8x256xbf16>, vector<256x256xbf16>, vector<8x256xf32> -> vector<8x256xf32>
    %c0_11 = arith.constant 0 : index
    %c0_12 = arith.constant 0 : index
    %16 = vector.load %arg6[%c0_11, %c0_12] : memref<8x256xf32, #tpu.memory_space<vmem>>, vector<8x256xf32>
    tpu.vector_store %arg6[%c0_11, %c0_12], %15 {strides = array<i32>} : memref<8x256xf32, #tpu.memory_space<vmem>>, vector<8x256xf32>,
    return
  }
  func.func @transform_0(%arg0: i32) -> (i32, i32) {
    %c0_i32 = arith.constant 0 : i32
    %c0_i32_0 = arith.constant 0 : i32
    return %arg0, %c0_i32 : i32, i32
  }
  func.func @transform_1(%arg0: i32) -> (i32, i32) {
    %c0_i32 = arith.constant 0 : i32
    %c0_i32_0 = arith.constant 0 : i32
    return %arg0, %c0_i32 : i32, i32
  }
  func.func @transform_2(%arg0: i32) -> (i32, i32) {
    %c0_i32 = arith.constant 0 : i32
    %c0_i32_0 = arith.constant 0 : i32
    %c0_i32_1 = arith.constant 0 : i32
    return %c0_i32, %c0_i32_0 : i32, i32
  }
  func.func @transform_3(%arg0: i32) -> (i32, i32) {
    %c0_i32 = arith.constant 0 : i32
    %c0_i32_0 = arith.constant 0 : i32
    %c0_i32_1 = arith.constant 0 : i32
    return %c0_i32, %c0_i32_0 : i32, i32
  }
  func.func @transform_4(%arg0: i32) -> (i32, i32) {
    %c0_i32 = arith.constant 0 : i32
    %c0_i32_0 = arith.constant 0 : i32
    %c0_i32_1 = arith.constant 0 : i32
    return %c0_i32, %c0_i32_0 : i32, i32
  }
  func.func @transform_5(%arg0: i32) -> (i32, i32) {
    %c0_i32 = arith.constant 0 : i32
    %c0_i32_0 = arith.constant 0 : i32
    return %arg0, %c0_i32 : i32, i32
  }
}

</mosaic_0001>

<llo_original>
// kernel: tpu_custom_call.1
$region0: #{tpu_custom_call.1}
  #allocation0 [shape = 'u32[]', space=smem, size = 0x4, offset = 0x4, fixed_abs, tag = 'smem constant byte address 0x4 - core index']
  #allocation1 [shape = 'u32[144,128]{1,0:T(1,128)}', space=vmem, size = 0x12000, scoped, tag = 'internal scratch']
  %s0 = inlined_call_operand.vmem [shape: f32[8,1], index: 0, kind: input, shape index: {}]
  %s1 = inlined_call_operand.hbm [shape: f32[8,256], index: 1, kind: input, shape index: {}, may-alias: {1,5}]
  %s2 = inlined_call_operand.hbm [shape: bf16[256,256], index: 2, kind: input, shape index: {}]
  %s3 = inlined_call_operand.hbm [shape: bf16[256,256], index: 3, kind: input, shape index: {}]
  %s4 = inlined_call_operand.vmem [shape: f32[1,256], index: 4, kind: input, shape index: {}]
  %s5 = inlined_call_operand.hbm [shape: f32[8,256], index: 5, kind: output, shape index: {}, may-alias: {1,5}]
  %s6 = sld [smem:[#allocation0]]
  $region42: #{tpu_custom_call.1} parent=0
    _
  %s8 = ssub.s32 1, %s6
  %s9 = scalar_select 0, %s8, %s6
  $region1: #{tpu_custom_call.1} parent=0
    #allocation2 [shape = 'u8[8192]{0}', space=vmem, size = 0x2000, scoped, tag = 'input window, operand 1, single buffered']
    #allocation3 [shape = 's32[1]{0}', space=sflag, size = 0x4, scoped, tag = 'scoped memory for tpu_custom_call.1']
    #allocation4 [shape = 's32[1]{0}', space=sflag, size = 0x4, scoped, tag = 'scoped memory for tpu_custom_call.1']
    #allocation5 [shape = 'u8[131072]{0}', space=vmem, size = 0x20000, scoped, tag = 'input window, operand 2, single buffered']
    #allocation6 [shape = 's32[1]{0}', space=sflag, size = 0x4, scoped, tag = 'scoped memory for tpu_custom_call.1']
    #allocation7 [shape = 'u8[131072]{0}', space=vmem, size = 0x20000, scoped, tag = 'input window, operand 3, single buffered']
    #allocation8 [shape = 'u8[8192]{0}', space=vmem, size = 0x2000, scoped, tag = 'output window, operand 0, single buffered']
    %10 = vsyncpa [#allocation3], 0
    %11 = vsyncpa [#allocation6], 0
    %12 = vsyncpa [#allocation4], 0
    // Predicated region
    $region2: #{tpu_custom_call.1} parent=1 // pred_check
      _
    $region3: #{tpu_custom_call.1} parent=1 // pred_check_branch
      %14 = sbr.rel (0) target = $region5
    $region4: #{tpu_custom_call.1} parent=1 // pred_region
      _
    $region5: #{tpu_custom_call.1} parent=1 // pred_fallthru
      _
    // Predicated region
    $region6: #{tpu_custom_call.1} parent=1 // pred_check
      _
    $region7: #{tpu_custom_call.1} parent=1 // pred_check_branch
      %16 = sbr.rel (0) target = $region9
    $region8: #{tpu_custom_call.1} parent=1 // pred_region
      %s18 = ssub.s32 256, 256
      %19 = vsyncadd [#allocation3], %s18
      %s21 = sshll.u32 [#allocation2], 4
      %s22 = int_to_ptr.vmem [resolvable:$true] %s21
      %24 = dma.hbm_to_vmem [thread:$0]  %s1, 256, %s22, [#allocation3]
    $region9: #{tpu_custom_call.1} parent=1 // pred_fallthru
      _
    // Predicated region
    $region10: #{tpu_custom_call.1} parent=1 // pred_check
      _
    $region11: #{tpu_custom_call.1} parent=1 // pred_check_branch
      %26 = sbr.rel (0) target = $region13
    $region12: #{tpu_custom_call.1} parent=1 // pred_region
      %s28 = ssub.s32 4096, 4096
      %29 = vsyncadd [#allocation6], %s28
      %s30 = sshll.u32 [#allocation5], 4
      %s31 = int_to_ptr.vmem [resolvable:$true] %s30
      %36 = dma.hbm_to_vmem [thread:$0]  %s2, 4096, %s31, [#allocation6], 128, 128, 8
    $region13: #{tpu_custom_call.1} parent=1 // pred_fallthru
      _
    // Predicated region
    $region14: #{tpu_custom_call.1} parent=1 // pred_check
      _
    $region15: #{tpu_custom_call.1} parent=1 // pred_check_branch
      %38 = sbr.rel (0) target = $region17
    $region16: #{tpu_custom_call.1} parent=1 // pred_region
      %s40 = ssub.s32 4096, 4096
      %41 = vsyncadd [#allocation6], %s40
      %s42 = sshll.u32 [#allocation7], 4
      %s43 = int_to_ptr.vmem [resolvable:$true] %s42
      %48 = dma.hbm_to_vmem [thread:$0]  %s3, 4096, %s43, [#allocation6], 128, 128, 8
    $region17: #{tpu_custom_call.1} parent=1 // pred_fallthru
      _
    // Predicated region
    $region18: #{tpu_custom_call.1} parent=1 // pred_check
      _
    $region19: #{tpu_custom_call.1} parent=1 // pred_check_branch
      %50 = sbr.rel (0) target = $region21
    $region20: #{tpu_custom_call.1} parent=1 // pred_region
      _
    $region21: #{tpu_custom_call.1} parent=1 // pred_fallthru
      _
    // Predicated region
    $region22: #{tpu_custom_call.1} parent=1 // pred_check
      _
    $region23: #{tpu_custom_call.1} parent=1 // pred_check_branch
      %52 = sbr.rel (0) target = $region25
    $region24: #{tpu_custom_call.1} parent=1 // pred_region
      %53 = dma.done [#allocation3], 256
    $region25: #{tpu_custom_call.1} parent=1 // pred_fallthru
      _
    // Predicated region
    $region26: #{tpu_custom_call.1} parent=1 // pred_check
      _
    $region27: #{tpu_custom_call.1} parent=1 // pred_check_branch
      %55 = sbr.rel (0) target = $region29
    $region28: #{tpu_custom_call.1} parent=1 // pred_region
      %56 = dma.done [#allocation6], 4096
    $region29: #{tpu_custom_call.1} parent=1 // pred_fallthru
      _
    // Predicated region
    $region30: #{tpu_custom_call.1} parent=1 // pred_check
      _
    $region31: #{tpu_custom_call.1} parent=1 // pred_check_branch
      %58 = sbr.rel (0) target = $region33
    $region32: #{tpu_custom_call.1} parent=1 // pred_region
      %59 = dma.done [#allocation6], 4096
    $region33: #{tpu_custom_call.1} parent=1 // pred_fallthru
      _
    %v60 = vld [vmem:[%s4] sm:$0x3]
    %v61 = vsub.f32 0.0, %v60
    %v62 = vld [vmem:[%s0] sm:$0xff]
    %v64 = vlaneseq
    %v65 = vshrl.u32 %v64, 7
    %v66 = vsub.s32 0, %v65
    %v67 = vrot.slane %v61, %v66
    %v68 = vlaneseq
    %v69 = vshrl.u32 %v68, 7
    %v70 = vsub.s32 1, %v69
    %v71 = vrot.slane %v61, %v70
    %75 = vset.pattern.permute.xlu0 0
    %76 = vperm.xlu0 %75, %v62
    %v77 = vpop.permute.xlu0 %76
    %v79 = vmul.f32 %v67, %v77
    %v80 = vmul.f32 %v71, %v77
    %v81 = vmul.f32 %v79, 1.442695
    %v82 = vpow.pop %v81
    %v83 = vmul.f32 %v80, 1.442695
    %v84 = vpow.pop %v83
    %v85 = vld [vmem:[#allocation2] sm:$0xff]
    %v86 = vld [vmem:[#allocation2 + $0x8] sm:$0xff]
    %v87 = vpack.c.bf16 %v85, %v85
    %v88 = vpack.c.bf16 %v86, %v86
    %v89 = vld [vmem:[#allocation5] sm:$0xff]
    %v90 = vld [vmem:[#allocation5 + $0x8] sm:$0xff]
    %v91 = vld [vmem:[#allocation5 + $0x10] sm:$0xff]
    %v92 = vld [vmem:[#allocation5 + $0x18] sm:$0xff]
    %v93 = vld [vmem:[#allocation5 + $0x20] sm:$0xff]
    %v94 = vld [vmem:[#allocation5 + $0x28] sm:$0xff]
    %v95 = vld [vmem:[#allocation5 + $0x30] sm:$0xff]
    %v96 = vld [vmem:[#allocation5 + $0x38] sm:$0xff]
    %v97 = vld [vmem:[#allocation5 + $0x40] sm:$0xff]
    %v98 = vld [vmem:[#allocation5 + $0x48] sm:$0xff]
    %v99 = vld [vmem:[#allocation5 + $0x50] sm:$0xff]
    %v100 = vld [vmem:[#allocation5 + $0x58] sm:$0xff]
    %v101 = vld [vmem:[#allocation5 + $0x60] sm:$0xff]
    %v102 = vld [vmem:[#allocation5 + $0x68] sm:$0xff]
    %v103 = vld [vmem:[#allocation5 + $0x70] sm:$0xff]
    %v104 = vld [vmem:[#allocation5 + $0x78] sm:$0xff]
    %v105 = vld [vmem:[#allocation5 + $0x80] sm:$0xff]
    %v106 = vld [vmem:[#allocation5 + $0x88] sm:$0xff]
    %v107 = vld [vmem:[#allocation5 + $0x90] sm:$0xff]
    %v108 = vld [vmem:[#allocation5 + $0x98] sm:$0xff]
    %v109 = vld [vmem:[#allocation5 + $0xa0] sm:$0xff]
    %v110 = vld [vmem:[#allocation5 + $0xa8] sm:$0xff]
    %v111 = vld [vmem:[#allocation5 + $0xb0] sm:$0xff]
    %v112 = vld [vmem:[#allocation5 + $0xb8] sm:$0xff]
    %v113 = vld [vmem:[#allocation5 + $0xc0] sm:$0xff]
    %v114 = vld [vmem:[#allocation5 + $0xc8] sm:$0xff]
    %v115 = vld [vmem:[#allocation5 + $0xd0] sm:$0xff]
    %v116 = vld [vmem:[#allocation5 + $0xd8] sm:$0xff]
    %v117 = vld [vmem:[#allocation5 + $0xe0] sm:$0xff]
    %v118 = vld [vmem:[#allocation5 + $0xe8] sm:$0xff]
    %v119 = vld [vmem:[#allocation5 + $0xf0] sm:$0xff]
    %v120 = vld [vmem:[#allocation5 + $0xf8] sm:$0xff]
    %v153 = vunpack.c.l.b16 %v89
    %v154 = vunpack.c.h.b16 %v89
    %v155 = vunpack.c.l.b16 %v90
    %v156 = vunpack.c.h.b16 %v90
    %v157 = vunpack.c.l.b16 %v91
    %v158 = vunpack.c.h.b16 %v91
    %v159 = vunpack.c.l.b16 %v92
    %v160 = vunpack.c.h.b16 %v92
    %v161 = vunpack.c.l.b16 %v93
    %v162 = vunpack.c.h.b16 %v93
    %v163 = vunpack.c.l.b16 %v94
    %v164 = vunpack.c.h.b16 %v94
    %v165 = vunpack.c.l.b16 %v95
    %v166 = vunpack.c.h.b16 %v95
    %v167 = vunpack.c.l.b16 %v96
    %v168 = vunpack.c.h.b16 %v96
    %v169 = vunpack.c.l.b16 %v97
    %v170 = vunpack.c.h.b16 %v97
    %v171 = vunpack.c.l.b16 %v98
    %v172 = vunpack.c.h.b16 %v98
    %v173 = vunpack.c.l.b16 %v99
    %v174 = vunpack.c.h.b16 %v99
    %v175 = vunpack.c.l.b16 %v100
    %v176 = vunpack.c.h.b16 %v100
    %v177 = vunpack.c.l.b16 %v101
    %v178 = vunpack.c.h.b16 %v101
    %v179 = vunpack.c.l.b16 %v102
    %v180 = vunpack.c.h.b16 %v102
    %v181 = vunpack.c.l.b16 %v103
    %v182 = vunpack.c.h.b16 %v103
    %v183 = vunpack.c.l.b16 %v104
    %v184 = vunpack.c.h.b16 %v104
    %v185 = vunpack.c.l.b16 %v105
    %v186 = vunpack.c.h.b16 %v105
    %v187 = vunpack.c.l.b16 %v106
    %v188 = vunpack.c.h.b16 %v106
    %v189 = vunpack.c.l.b16 %v107
    %v190 = vunpack.c.h.b16 %v107
    %v191 = vunpack.c.l.b16 %v108
    %v192 = vunpack.c.h.b16 %v108
    %v193 = vunpack.c.l.b16 %v109
    %v194 = vunpack.c.h.b16 %v109
    %v195 = vunpack.c.l.b16 %v110
    %v196 = vunpack.c.h.b16 %v110
    %v197 = vunpack.c.l.b16 %v111
    %v198 = vunpack.c.h.b16 %v111
    %v199 = vunpack.c.l.b16 %v112
    %v200 = vunpack.c.h.b16 %v112
    %v201 = vunpack.c.l.b16 %v113
    %v202 = vunpack.c.h.b16 %v113
    %v203 = vunpack.c.l.b16 %v114
    %v204 = vunpack.c.h.b16 %v114
    %v205 = vunpack.c.l.b16 %v115
    %v206 = vunpack.c.h.b16 %v115
    %v207 = vunpack.c.l.b16 %v116
    %v208 = vunpack.c.h.b16 %v116
    %v209 = vunpack.c.l.b16 %v117
    %v210 = vunpack.c.h.b16 %v117
    %v211 = vunpack.c.l.b16 %v118
    %v212 = vunpack.c.h.b16 %v118
    %v213 = vunpack.c.l.b16 %v119
    %v214 = vunpack.c.h.b16 %v119
    %v215 = vunpack.c.l.b16 %v120
    %v216 = vunpack.c.h.b16 %v120
    %v217 = vpack.c.b16 %v155, %v153
    %v218 = vpack.c.b16 %v156, %v154
    %v219 = vpack.c.b16 %v159, %v157
    %v220 = vpack.c.b16 %v160, %v158
    %v221 = vpack.c.b16 %v163, %v161
    %v222 = vpack.c.b16 %v164, %v162
    %v223 = vpack.c.b16 %v167, %v165
    %v224 = vpack.c.b16 %v168, %v166
    %v225 = vpack.c.b16 %v171, %v169
    %v226 = vpack.c.b16 %v172, %v170
    %v227 = vpack.c.b16 %v175, %v173
    %v228 = vpack.c.b16 %v176, %v174
    %v229 = vpack.c.b16 %v179, %v177
    %v230 = vpack.c.b16 %v180, %v178
    %v231 = vpack.c.b16 %v183, %v181
    %v232 = vpack.c.b16 %v184, %v182
    %v233 = vpack.c.b16 %v187, %v185
    %v234 = vpack.c.b16 %v188, %v186
    %v235 = vpack.c.b16 %v191, %v189
    %v236 = vpack.c.b16 %v192, %v190
    %v237 = vpack.c.b16 %v195, %v193
    %v238 = vpack.c.b16 %v196, %v194
    %v239 = vpack.c.b16 %v199, %v197
    %v240 = vpack.c.b16 %v200, %v198
    %v241 = vpack.c.b16 %v203, %v201
    %v242 = vpack.c.b16 %v204, %v202
    %v243 = vpack.c.b16 %v207, %v205
    %v244 = vpack.c.b16 %v208, %v206
    %v245 = vpack.c.b16 %v211, %v209
    %v246 = vpack.c.b16 %v212, %v210
    %v247 = vpack.c.b16 %v215, %v213
    %v248 = vpack.c.b16 %v216, %v214
    %281 = vmatprep.subr.bf16.mxu0 %v232
    %282 = vmatpush1.bf16.msra.mxu0 %v231
    %283 = vmatprep.subr.bf16.mxu0 %v230
    %284 = vmatpush1.bf16.msra.mxu0 %v229
    %285 = vmatprep.subr.bf16.mxu0 %v228
    %286 = vmatpush1.bf16.msra.mxu0 %v227
    %287 = vmatprep.subr.bf16.mxu0 %v226
    %288 = vmatpush1.bf16.msra.mxu0 %v225
    %289 = vmatprep.subr.bf16.mxu0 %v224
    %290 = vmatpush1.bf16.msra.mxu0 %v223
    %291 = vmatprep.subr.bf16.mxu0 %v222
    %292 = vmatpush1.bf16.msra.mxu0 %v221
    %293 = vmatprep.subr.bf16.mxu0 %v220
    %294 = vmatpush1.bf16.msra.mxu0 %v219
    %295 = vmatprep.subr.bf16.mxu0 %v218
    %296 = vmatpush1.bf16.msra.mxu0 %v217
    %297 = vmatprep.subr.bf16.mxu0 %v248
    %298 = vmatpush2.bf16.msra.mxu0 %v247
    %299 = vmatprep.subr.bf16.mxu0 %v246
    %300 = vmatpush2.bf16.msra.mxu0 %v245
    %301 = vmatprep.subr.bf16.mxu0 %v244
    %302 = vmatpush2.bf16.msra.mxu0 %v243
    %303 = vmatprep.subr.bf16.mxu0 %v242
    %304 = vmatpush2.bf16.msra.mxu0 %v241
    %305 = vmatprep.subr.bf16.mxu0 %v240
    %306 = vmatpush2.bf16.msra.mxu0 %v239
    %307 = vmatprep.subr.bf16.mxu0 %v238
    %308 = vmatpush2.bf16.msra.mxu0 %v237
    %309 = vmatprep.subr.bf16.mxu0 %v236
    %310 = vmatpush2.bf16.msra.mxu0 %v235
    %311 = vmatprep.subr.bf16.mxu0 %v234
    %312 = vmatpush2.bf16.msra.mxu0 %v233
    %313 = vmatprep.mubr.bf16.mxu0 %v88
    %314 = vmatmul.mubr.bf16.gmra.mxu0 %v87
    %v315 = vpop.f32.mrf.mxu0
    %v316 = vadd.f32 0.0, %v315
    %v317 = vpop.f32.mrf.mxu0
    %v318 = vadd.f32 0.0, %v317
    %v319 = vpop.f32.mrf.mxu0
    %v320 = vpop.f32.mrf.mxu0
    %321 = vdwg.mxu0
    %v322 = vmul.f32 %v316, %v82
    %v323 = vmul.f32 %v318, %v84
    %v324 = vpack.c.bf16 %v322, %v322
    %v325 = vpack.c.bf16 %v323, %v323
    %v326 = vld [vmem:[#allocation7] sm:$0xff]
    %v327 = vld [vmem:[#allocation7 + $0x8] sm:$0xff]
    %v328 = vld [vmem:[#allocation7 + $0x10] sm:$0xff]
    %v329 = vld [vmem:[#allocation7 + $0x18] sm:$0xff]
    %v330 = vld [vmem:[#allocation7 + $0x20] sm:$0xff]
    %v331 = vld [vmem:[#allocation7 + $0x28] sm:$0xff]
    %v332 = vld [vmem:[#allocation7 + $0x30] sm:$0xff]
    %v333 = vld [vmem:[#allocation7 + $0x38] sm:$0xff]
    %v334 = vld [vmem:[#allocation7 + $0x40] sm:$0xff]
    %v335 = vld [vmem:[#allocation7 + $0x48] sm:$0xff]
    %v336 = vld [vmem:[#allocation7 + $0x50] sm:$0xff]
    %v337 = vld [vmem:[#allocation7 + $0x58] sm:$0xff]
    %v338 = vld [vmem:[#allocation7 + $0x60] sm:$0xff]
    %v339 = vld [vmem:[#allocation7 + $0x68] sm:$0xff]
    %v340 = vld [vmem:[#allocation7 + $0x70] sm:$0xff]
    %v341 = vld [vmem:[#allocation7 + $0x78] sm:$0xff]
    %v342 = vld [vmem:[#allocation7 + $0x80] sm:$0xff]
    %v343 = vld [vmem:[#allocation7 + $0x88] sm:$0xff]
    %v344 = vld [vmem:[#allocation7 + $0x90] sm:$0xff]
    %v345 = vld [vmem:[#allocation7 + $0x98] sm:$0xff]
    %v346 = vld [vmem:[#allocation7 + $0xa0] sm:$0xff]
    %v347 = vld [vmem:[#allocation7 + $0xa8] sm:$0xff]
    %v348 = vld [vmem:[#allocation7 + $0xb0] sm:$0xff]
    %v349 = vld [vmem:[#allocation7 + $0xb8] sm:$0xff]
    %v350 = vld [vmem:[#allocation7 + $0xc0] sm:$0xff]
    %v351 = vld [vmem:[#allocation7 + $0xc8] sm:$0xff]
    %v352 = vld [vmem:[#allocation7 + $0xd0] sm:$0xff]
    %v353 = vld [vmem:[#allocation7 + $0xd8] sm:$0xff]
    %v354 = vld [vmem:[#allocation7 + $0xe0] sm:$0xff]
    %v355 = vld [vmem:[#allocation7 + $0xe8] sm:$0xff]
    %v356 = vld [vmem:[#allocation7 + $0xf0] sm:$0xff]
    %v357 = vld [vmem:[#allocation7 + $0xf8] sm:$0xff]
    %v390 = vunpack.c.l.b16 %v326
    %v391 = vunpack.c.h.b16 %v326
    %v392 = vunpack.c.l.b16 %v327
    %v393 = vunpack.c.h.b16 %v327
    %v394 = vunpack.c.l.b16 %v328
    %v395 = vunpack.c.h.b16 %v328
    %v396 = vunpack.c.l.b16 %v329
    %v397 = vunpack.c.h.b16 %v329
    %v398 = vunpack.c.l.b16 %v330
    %v399 = vunpack.c.h.b16 %v330
    %v400 = vunpack.c.l.b16 %v331
    %v401 = vunpack.c.h.b16 %v331
    %v402 = vunpack.c.l.b16 %v332
    %v403 = vunpack.c.h.b16 %v332
    %v404 = vunpack.c.l.b16 %v333
    %v405 = vunpack.c.h.b16 %v333
    %v406 = vunpack.c.l.b16 %v334
    %v407 = vunpack.c.h.b16 %v334
    %v408 = vunpack.c.l.b16 %v335
    %v409 = vunpack.c.h.b16 %v335
    %v410 = vunpack.c.l.b16 %v336
    %v411 = vunpack.c.h.b16 %v336
    %v412 = vunpack.c.l.b16 %v337
    %v413 = vunpack.c.h.b16 %v337
    %v414 = vunpack.c.l.b16 %v338
    %v415 = vunpack.c.h.b16 %v338
    %v416 = vunpack.c.l.b16 %v339
    %v417 = vunpack.c.h.b16 %v339
    %v418 = vunpack.c.l.b16 %v340
    %v419 = vunpack.c.h.b16 %v340
    %v420 = vunpack.c.l.b16 %v341
    %v421 = vunpack.c.h.b16 %v341
    %v422 = vunpack.c.l.b16 %v342
    %v423 = vunpack.c.h.b16 %v342
    %v424 = vunpack.c.l.b16 %v343
    %v425 = vunpack.c.h.b16 %v343
    %v426 = vunpack.c.l.b16 %v344
    %v427 = vunpack.c.h.b16 %v344
    %v428 = vunpack.c.l.b16 %v345
    %v429 = vunpack.c.h.b16 %v345
    %v430 = vunpack.c.l.b16 %v346
    %v431 = vunpack.c.h.b16 %v346
    %v432 = vunpack.c.l.b16 %v347
    %v433 = vunpack.c.h.b16 %v347
    %v434 = vunpack.c.l.b16 %v348
    %v435 = vunpack.c.h.b16 %v348
    %v436 = vunpack.c.l.b16 %v349
    %v437 = vunpack.c.h.b16 %v349
    %v438 = vunpack.c.l.b16 %v350
    %v439 = vunpack.c.h.b16 %v350
    %v440 = vunpack.c.l.b16 %v351
    %v441 = vunpack.c.h.b16 %v351
    %v442 = vunpack.c.l.b16 %v352
    %v443 = vunpack.c.h.b16 %v352
    %v444 = vunpack.c.l.b16 %v353
    %v445 = vunpack.c.h.b16 %v353
    %v446 = vunpack.c.l.b16 %v354
    %v447 = vunpack.c.h.b16 %v354
    %v448 = vunpack.c.l.b16 %v355
    %v449 = vunpack.c.h.b16 %v355
    %v450 = vunpack.c.l.b16 %v356
    %v451 = vunpack.c.h.b16 %v356
    %v452 = vunpack.c.l.b16 %v357
    %v453 = vunpack.c.h.b16 %v357
    %v454 = vpack.c.b16 %v392, %v390
    %v455 = vpack.c.b16 %v393, %v391
    %v456 = vpack.c.b16 %v396, %v394
    %v457 = vpack.c.b16 %v397, %v395
    %v458 = vpack.c.b16 %v400, %v398
    %v459 = vpack.c.b16 %v401, %v399
    %v460 = vpack.c.b16 %v404, %v402
    %v461 = vpack.c.b16 %v405, %v403
    %v462 = vpack.c.b16 %v408, %v406
    %v463 = vpack.c.b16 %v409, %v407
    %v464 = vpack.c.b16 %v412, %v410
    %v465 = vpack.c.b16 %v413, %v411
    %v466 = vpack.c.b16 %v416, %v414
    %v467 = vpack.c.b16 %v417, %v415
    %v468 = vpack.c.b16 %v420, %v418
    %v469 = vpack.c.b16 %v421, %v419
    %v470 = vpack.c.b16 %v424, %v422
    %v471 = vpack.c.b16 %v425, %v423
    %v472 = vpack.c.b16 %v428, %v426
    %v473 = vpack.c.b16 %v429, %v427
    %v474 = vpack.c.b16 %v432, %v430
    %v475 = vpack.c.b16 %v433, %v431
    %v476 = vpack.c.b16 %v436, %v434
    %v477 = vpack.c.b16 %v437, %v435
    %v478 = vpack.c.b16 %v440, %v438
    %v479 = vpack.c.b16 %v441, %v439
    %v480 = vpack.c.b16 %v444, %v442
    %v481 = vpack.c.b16 %v445, %v443
    %v482 = vpack.c.b16 %v448, %v446
    %v483 = vpack.c.b16 %v449, %v447
    %v484 = vpack.c.b16 %v452, %v450
    %v485 = vpack.c.b16 %v453, %v451
    %518 = vmatprep.subr.bf16.mxu0 %v469
    %519 = vmatpush1.bf16.msra.mxu0 %v468
    %520 = vmatprep.subr.bf16.mxu0 %v467
    %521 = vmatpush1.bf16.msra.mxu0 %v466
    %522 = vmatprep.subr.bf16.mxu0 %v465
    %523 = vmatpush1.bf16.msra.mxu0 %v464
    %524 = vmatprep.subr.bf16.mxu0 %v463
    %525 = vmatpush1.bf16.msra.mxu0 %v462
    %526 = vmatprep.subr.bf16.mxu0 %v461
    %527 = vmatpush1.bf16.msra.mxu0 %v460
    %528 = vmatprep.subr.bf16.mxu0 %v459
    %529 = vmatpush1.bf16.msra.mxu0 %v458
    %530 = vmatprep.subr.bf16.mxu0 %v457
    %531 = vmatpush1.bf16.msra.mxu0 %v456
    %532 = vmatprep.subr.bf16.mxu0 %v455
    %533 = vmatpush1.bf16.msra.mxu0 %v454
    %534 = vmatprep.subr.bf16.mxu0 %v485
    %535 = vmatpush2.bf16.msra.mxu0 %v484
    %536 = vmatprep.subr.bf16.mxu0 %v483
    %537 = vmatpush2.bf16.msra.mxu0 %v482
    %538 = vmatprep.subr.bf16.mxu0 %v481
    %539 = vmatpush2.bf16.msra.mxu0 %v480
    %540 = vmatprep.subr.bf16.mxu0 %v479
    %541 = vmatpush2.bf16.msra.mxu0 %v478
    %542 = vmatprep.subr.bf16.mxu0 %v477
    %543 = vmatpush2.bf16.msra.mxu0 %v476
    %544 = vmatprep.subr.bf16.mxu0 %v475
    %545 = vmatpush2.bf16.msra.mxu0 %v474
    %546 = vmatprep.subr.bf16.mxu0 %v473
    %547 = vmatpush2.bf16.msra.mxu0 %v472
    %548 = vmatprep.subr.bf16.mxu0 %v471
    %549 = vmatpush2.bf16.msra.mxu0 %v470
    %550 = vmatprep.mubr.bf16.mxu0 %v325
    %551 = vmatmul.mubr.bf16.gmra.mxu0 %v324
    %v552 = vpop.f32.mrf.mxu0
    %v553 = vadd.f32 0.0, %v552
    %v554 = vpop.f32.mrf.mxu0
    %v555 = vadd.f32 0.0, %v554
    %v556 = vpop.f32.mrf.mxu0
    %v557 = vpop.f32.mrf.mxu0
    %558 = vdwg.mxu0
    %559 = vst [vmem:[#allocation8] sm:$0xff] %v553
    %560 = vst [vmem:[#allocation8 + $0x8] sm:$0xff] %v555
    // Predicated region
    $region34: #{tpu_custom_call.1} parent=1 // pred_check
      _
    $region35: #{tpu_custom_call.1} parent=1 // pred_check_branch
      %562 = sbr.rel (0) target = $region37
    $region36: #{tpu_custom_call.1} parent=1 // pred_region
      %s564 = ssub.s32 256, 256
      %565 = vsyncadd [#allocation4], %s564
      %s567 = sshll.u32 [#allocation8], 4
      %s568 = int_to_ptr.vmem [resolvable:$true] %s567
      %570 = dma.vmem_to_hbm [thread:$0]  %s568, 256, %s5, [#allocation4]
    $region37: #{tpu_custom_call.1} parent=1 // pred_fallthru
      _
    // Predicated region
    $region38: #{tpu_custom_call.1} parent=1 // pred_check
      _
    $region39: #{tpu_custom_call.1} parent=1 // pred_check_branch
      %572 = sbr.rel (0) target = $region41
    $region40: #{tpu_custom_call.1} parent=1 // pred_region
      %573 = dma.done [#allocation4], 256
    $region41: #{tpu_custom_call.1} parent=1 // pred_fallthru
      _
    %574 = vsyncpa [#allocation3], 1
    %575 = vsyncpa [#allocation6], 1
    %576 = vsyncpa [#allocation4], 1

</llo_original>
